<compile_context>
chip_gen: v7x
topology: tpu7x:2x2x1
jax: 0.10.0
libtpu: 0.0.40
codegen_flags: <defaults>
</compile_context>

<pallas_src>
import functools

import jax
import jax.numpy as jnp
from jax import lax
from jax.experimental import pallas as pl
from jax.experimental.pallas import tpu as pltpu

_LANE = 128
_SUBLANE = 8
_VMEM = pl.BlockSpec(memory_space=pltpu.MemorySpace.VMEM)


def _round_up(x, m):
    return -(-x // m) * m


# ------------------------------ fused kernel -------------------------------

def _fused_convnet_kernel(x_ref, *refs, n, t_pad, t_valid, layer_ks):
    """Whole ConvNetSimple forward in one launch.

    x_ref : (M, cp0) f32   flat activation, M = N*T_pad (time-major per batch),
                           channels lane-padded to cp0, time zero-padded to T_pad.
    refs  : (w_0, b_0, ..., w_{L-1}, b_{L-1}, w_lin, b_lin, o_ref)
      w_l   : (K_l, cp_in_l, cp_out_l) bf16  Conv1d taps, channels lane-padded
      b_l   : (1, cp_out_l)            f32   conv bias (padded with zeros)
      w_lin : (cp_last, cp_head)       bf16  linear weight (padded)
      b_lin : (1, cp_head)             f32   linear bias (padded)
      o_ref : (N, cp_head)             f32   lane-dense padded output
    """
    o_ref = refs[-1]
    wl_ref, bl_ref = refs[-3], refs[-2]
    conv_refs = refs[:-3]
    m_rows = n * t_pad

    y = x_ref[...]                                           # (M, cp0) f32
    for l, k in enumerate(layer_ks):                         # static unroll
        w_ref, b_ref = conv_refs[2 * l], conv_refs[2 * l + 1]
        y_bf = y.astype(jnp.bfloat16)                        # one cast per layer
        # out[i] = sum_j y[i+j] @ W_j  ==  sum_j roll(y @ W_j, -j)
        # -> K 2-D bf16 MXU matmuls on the unshifted activation, time shift on
        #    the f32 result via XLU roll (no misaligned slices / patch buffer).
        h = jnp.dot(y_bf, w_ref[0], preferred_element_type=jnp.float32)
        for j in range(1, k):
            z = jnp.dot(y_bf, w_ref[j], preferred_element_type=jnp.float32)
            h = h + pltpu.roll(z, shift=m_rows - j, axis=0)  # rows i <- z[i+j]
        y = jnp.maximum(h + b_ref[...], 0.0)                 # bias + ReLU in f32

    # Mask garbage tail rows (time index >= t_valid per batch; they hold
    # relu(bias)/roll wrap values) and mean-pool over time in f32.
    cp_last = y.shape[-1]
    y3 = y.reshape(n, t_pad, cp_last)
    t_idx = lax.broadcasted_iota(jnp.int32, (1, t_pad, 1), 1)
    y3 = jnp.where(t_idx < t_valid, y3, 0.0)
    pooled = jnp.sum(y3, axis=1) * (1.0 / t_valid)           # (N, cp_last) f32

    # Linear head: bf16 MXU matmul, f32 accumulate + bias.
    o_ref[...] = (jnp.dot(pooled.astype(jnp.bfloat16), wl_ref[...],
                          preferred_element_type=jnp.float32)
                  + bl_ref[...])


# -------------------------------- wrappers ---------------------------------

def prepare_convnet_params(conv_params, lin_w, lin_b, lane=_LANE):
    """One-time wrapper-side prep:
      * per-layer lane padding: each channel dim -> round_up(C, 128),
      * conv weights kept as (K, cp_in, cp_out) for per-tap matmuls,
      * weights cast to bf16 (MXU operands); biases stay f32 (VPU side).
    Zero-padded channels stay exactly zero through conv+bias+ReLU, so the
    padded network matches the original in its first Cout output columns.
    """
    chans = [conv_params[0][0].shape[1]] + [w.shape[2] for w, _ in conv_params]
    cps = [_round_up(c, lane) for c in chans]

    packed, ks = [], []
    for l, (w, b) in enumerate(conv_params):
        k, cin, cout = w.shape
        ks.append(k)
        w_p = jnp.pad(w, ((0, 0), (0, cps[l] - cin), (0, cps[l + 1] - cout)))
        packed.append(w_p.astype(jnp.bfloat16))              # (K, cp_in, cp_out)
        packed.append(jnp.pad(b, ((0, 0), (0, cps[l + 1] - cout)))
                      .astype(jnp.float32))

    cp_lin_in = cps[-1]
    cp_lin_out = _round_up(lin_w.shape[1], lane)
    wl_p = jnp.pad(lin_w, ((0, cp_lin_in - lin_w.shape[0]),
                           (0, cp_lin_out - lin_w.shape[1])))
    bl_p = jnp.pad(lin_b, ((0, 0), (0, cp_lin_out - lin_b.shape[1])))
    packed += [wl_p.astype(jnp.bfloat16), bl_p.astype(jnp.float32)]

    meta = dict(ks=tuple(ks), cp_in=cps[0], cp_out=cp_lin_out)
    return tuple(packed), meta


def convnet_simple_forward(x_nct, packed_params, *, ks, cp_in, cp_out, n_out):
    """Full forward pass.  x_nct: (N, C_in, T) like the PyTorch module."""
    n, c_in, t = x_nct.shape
    t_pad = _round_up(t, _SUBLANE)                     # 8-aligned M axis
    t_valid = t - sum(k - 1 for k in ks)               # valid time steps after convs

    x = jnp.transpose(x_nct, (0, 2, 1)).astype(jnp.float32)     # NCT -> NTC
    x = jnp.pad(x, ((0, 0), (0, t_pad - t), (0, cp_in - c_in)))  # time+lane pad
    x = x.reshape(n * t_pad, cp_in)                    # flat (M, cp0), M % 8 == 0

    kernel = functools.partial(_fused_convnet_kernel,
                               n=n, t_pad=t_pad, t_valid=t_valid, layer_ks=ks)
    out_pad = pl.pallas_call(
        kernel,
        out_shape=jax.ShapeDtypeStruct((n, cp_out), jnp.float32),
        in_specs=[_VMEM] * (1 + len(packed_params)),
        out_specs=_VMEM,
    )(x, *packed_params)
    # pooled.squeeze() in the reference is a no-op for N > 1, Cout > 1.
    return out_pad[:, :n_out]


# ------------------------------- reference ---------------------------------

def convnet_simple_ref(x_nct, conv_params, lin_w, lin_b):
    """Pure-JAX f32 reference matching PyTorch Conv1d semantics (NCT layout)."""
    y = x_nct
    for (w_kio, b_1o) in conv_params:
        w_oik = jnp.transpose(w_kio, (2, 1, 0))               # (Cout, Cin, K)
        y = jax.lax.conv_general_dilated(
            y, w_oik, window_strides=(1,), padding="VALID",
            dimension_numbers=("NCH", "OIH", "NCH"))
        y = jnp.maximum(y + b_1o[0][None, :, None], 0.0)
    pooled = y.mean(axis=2)                                   # (N, Cout)
    return pooled @ lin_w + lin_b[0][None, :]


# ---------------------------------- main ------------------------------------

if __name__ == "__main__":
    # ConvNetSimple(convolutional_layers=[4, 8, 16], kernel_sizes=[3, 3])
    convolutional_layers = [4, 8, 16]
    kernel_sizes = [3, 3]
    N, T = 2, 16

    key = jax.random.PRNGKey(0)
    conv_params = []
    for cin, cout, ksz in zip(convolutional_layers,
                              convolutional_layers[1:], kernel_sizes):
        key, kw, kb = jax.random.split(key, 3)
        # stored as (K, Cin, Cout) for the kernel
        w = jax.random.normal(kw, (ksz, cin, cout), jnp.float32) * 0.1
        b = jax.random.normal(kb, (1, cout), jnp.float32) * 0.1
        conv_params.append((w, b))

    c_out = convolutional_layers[-1]
    key, kw, kb = jax.random.split(key, 3)
    lin_w = jax.random.normal(kw, (c_out, c_out), jnp.float32) * 0.1  # (Cin, Cout)
    lin_b = jax.random.normal(kb, (1, c_out), jnp.float32) * 0.1

    key, kx = jax.random.split(key)
    x = jax.random.normal(kx, (N, convolutional_layers[0], T), jnp.float32)

    packed_params, meta = prepare_convnet_params(conv_params, lin_w, lin_b)
    fwd = jax.jit(convnet_simple_forward,
                  static_argnames=("ks", "cp_in", "cp_out", "n_out"))
    out = jax.block_until_ready(
        fwd(x, packed_params, ks=meta["ks"], cp_in=meta["cp_in"],
            cp_out=meta["cp_out"], n_out=c_out))

    ref = convnet_simple_ref(x, conv_params, lin_w, lin_b)
    assert out.shape == (N, c_out), out.shape
    max_err = float(jnp.max(jnp.abs(out - ref)))
    # bf16 MXU operands with f32 accumulation -> relaxed tolerance vs f32 ref.
    assert jnp.allclose(out, ref, atol=2e-2, rtol=2e-2), \
        f"mismatch vs reference (max abs err {max_err})"

    print("KERNEL_OK")
</pallas_src>

<mosaic_0001>
module attributes {stable_mosaic.version = 11 : i64} {
  func.func @_fused_convnet_kernel(%arg0: memref<32x128xf32, #tpu.memory_space<vmem>>, %arg1: memref<3x128x128xbf16, #tpu.memory_space<vmem>>, %arg2: memref<1x128xf32, #tpu.memory_space<vmem>>, %arg3: memref<3x128x128xbf16, #tpu.memory_space<vmem>>, %arg4: memref<1x128xf32, #tpu.memory_space<vmem>>, %arg5: memref<128x128xbf16, #tpu.memory_space<vmem>>, %arg6: memref<1x128xf32, #tpu.memory_space<vmem>>, %arg7: memref<2x128xf32, #tpu.memory_space<vmem>>) attributes {dimension_semantics = [], scalar_prefetch = 0 : i64, scratch_operands = 0 : i64, tpu.core_type = #tpu.core_type<tc>} {
    %c0 = arith.constant 0 : index
    %c0_0 = arith.constant 0 : index
    %0 = vector.load %arg0[%c0, %c0_0] : memref<32x128xf32, #tpu.memory_space<vmem>>, vector<32x128xf32>
    %1 = arith.truncf %0 : vector<32x128xf32> to vector<32x128xbf16>
    %c0_1 = arith.constant 0 : index
    %c0_2 = arith.constant 0 : index
    %c0_3 = arith.constant 0 : index
    %2 = vector.load %arg1[%c0_1, %c0_2, %c0_3] : memref<3x128x128xbf16, #tpu.memory_space<vmem>>, vector<1x128x128xbf16>
    %3 = vector.shape_cast %2 : vector<1x128x128xbf16> to vector<128x128xbf16>
    %cst = arith.constant dense<0.000000e+00> : vector<32x128xf32>
    %4 = tpu.matmul %1, %3, %cst {dimension_numbers = #tpu.dot_dimension_numbers<[1], [0], [0], [1], [0, 0, 1, 1], [], []>} : vector<32x128xbf16>, vector<128x128xbf16>, vector<32x128xf32> -> vector<32x128xf32>
    %c1 = arith.constant 1 : index
    %c0_4 = arith.constant 0 : index
    %c0_5 = arith.constant 0 : index
    %5 = vector.load %arg1[%c1, %c0_4, %c0_5] : memref<3x128x128xbf16, #tpu.memory_space<vmem>>, vector<1x128x128xbf16>
    %6 = vector.shape_cast %5 : vector<1x128x128xbf16> to vector<128x128xbf16>
    %cst_6 = arith.constant dense<0.000000e+00> : vector<32x128xf32>
    %7 = tpu.matmul %1, %6, %cst_6 {dimension_numbers = #tpu.dot_dimension_numbers<[1], [0], [0], [1], [0, 0, 1, 1], [], []>} : vector<32x128xbf16>, vector<128x128xbf16>, vector<32x128xf32> -> vector<32x128xf32>
    %c31_i32 = arith.constant 31 : i32
    %8 = tpu.dynamic_rotate %7 by %c31_i32 dim 0 : vector<32x128xf32>, i32 -> vector<32x128xf32>
    %9 = arith.addf %4, %8 : vector<32x128xf32>
    %c2 = arith.constant 2 : index
    %c0_7 = arith.constant 0 : index
    %c0_8 = arith.constant 0 : index
    %10 = vector.load %arg1[%c2, %c0_7, %c0_8] : memref<3x128x128xbf16, #tpu.memory_space<vmem>>, vector<1x128x128xbf16>
    %11 = vector.shape_cast %10 : vector<1x128x128xbf16> to vector<128x128xbf16>
    %cst_9 = arith.constant dense<0.000000e+00> : vector<32x128xf32>
    %12 = tpu.matmul %1, %11, %cst_9 {dimension_numbers = #tpu.dot_dimension_numbers<[1], [0], [0], [1], [0, 0, 1, 1], [], []>} : vector<32x128xbf16>, vector<128x128xbf16>, vector<32x128xf32> -> vector<32x128xf32>
    %c30_i32 = arith.constant 30 : i32
    %13 = tpu.dynamic_rotate %12 by %c30_i32 dim 0 : vector<32x128xf32>, i32 -> vector<32x128xf32>
    %14 = arith.addf %9, %13 : vector<32x128xf32>
    %c0_10 = arith.constant 0 : index
    %c0_11 = arith.constant 0 : index
    %15 = vector.load %arg2[%c0_10, %c0_11] : memref<1x128xf32, #tpu.memory_space<vmem>>, vector<1x128xf32>
    %16 = vector.broadcast %15 : vector<1x128xf32> to vector<32x128xf32>
    %17 = arith.addf %14, %16 : vector<32x128xf32>
    %cst_12 = arith.constant 0.000000e+00 : f32
    %18 = vector.broadcast %cst_12 : f32 to vector<32x128xf32>
    %19 = arith.maximumf %17, %18 : vector<32x128xf32>
    %20 = arith.truncf %19 : vector<32x128xf32> to vector<32x128xbf16>
    %c0_13 = arith.constant 0 : index
    %c0_14 = arith.constant 0 : index
    %c0_15 = arith.constant 0 : index
    %21 = vector.load %arg3[%c0_13, %c0_14, %c0_15] : memref<3x128x128xbf16, #tpu.memory_space<vmem>>, vector<1x128x128xbf16>
    %22 = vector.shape_cast %21 : vector<1x128x128xbf16> to vector<128x128xbf16>
    %cst_16 = arith.constant dense<0.000000e+00> : vector<32x128xf32>
    %23 = tpu.matmul %20, %22, %cst_16 {dimension_numbers = #tpu.dot_dimension_numbers<[1], [0], [0], [1], [0, 0, 1, 1], [], []>} : vector<32x128xbf16>, vector<128x128xbf16>, vector<32x128xf32> -> vector<32x128xf32>
    %c1_17 = arith.constant 1 : index
    %c0_18 = arith.constant 0 : index
    %c0_19 = arith.constant 0 : index
    %24 = vector.load %arg3[%c1_17, %c0_18, %c0_19] : memref<3x128x128xbf16, #tpu.memory_space<vmem>>, vector<1x128x128xbf16>
    %25 = vector.shape_cast %24 : vector<1x128x128xbf16> to vector<128x128xbf16>
    %cst_20 = arith.constant dense<0.000000e+00> : vector<32x128xf32>
    %26 = tpu.matmul %20, %25, %cst_20 {dimension_numbers = #tpu.dot_dimension_numbers<[1], [0], [0], [1], [0, 0, 1, 1], [], []>} : vector<32x128xbf16>, vector<128x128xbf16>, vector<32x128xf32> -> vector<32x128xf32>
    %c31_i32_21 = arith.constant 31 : i32
    %27 = tpu.dynamic_rotate %26 by %c31_i32_21 dim 0 : vector<32x128xf32>, i32 -> vector<32x128xf32>
    %28 = arith.addf %23, %27 : vector<32x128xf32>
    %c2_22 = arith.constant 2 : index
    %c0_23 = arith.constant 0 : index
    %c0_24 = arith.constant 0 : index
    %29 = vector.load %arg3[%c2_22, %c0_23, %c0_24] : memref<3x128x128xbf16, #tpu.memory_space<vmem>>, vector<1x128x128xbf16>
    %30 = vector.shape_cast %29 : vector<1x128x128xbf16> to vector<128x128xbf16>
    %cst_25 = arith.constant dense<0.000000e+00> : vector<32x128xf32>
    %31 = tpu.matmul %20, %30, %cst_25 {dimension_numbers = #tpu.dot_dimension_numbers<[1], [0], [0], [1], [0, 0, 1, 1], [], []>} : vector<32x128xbf16>, vector<128x128xbf16>, vector<32x128xf32> -> vector<32x128xf32>
    %c30_i32_26 = arith.constant 30 : i32
    %32 = tpu.dynamic_rotate %31 by %c30_i32_26 dim 0 : vector<32x128xf32>, i32 -> vector<32x128xf32>
    %33 = arith.addf %28, %32 : vector<32x128xf32>
    %c0_27 = arith.constant 0 : index
    %c0_28 = arith.constant 0 : index
    %34 = vector.load %arg4[%c0_27, %c0_28] : memref<1x128xf32, #tpu.memory_space<vmem>>, vector<1x128xf32>
    %35 = vector.broadcast %34 : vector<1x128xf32> to vector<32x128xf32>
    %36 = arith.addf %33, %35 : vector<32x128xf32>
    %cst_29 = arith.constant 0.000000e+00 : f32
    %37 = vector.broadcast %cst_29 : f32 to vector<32x128xf32>
    %38 = arith.maximumf %36, %37 : vector<32x128xf32>
    %39 = vector.shape_cast %38 : vector<32x128xf32> to vector<2x16x128xf32>
    %40 = tpu.iota {dimensions = array<i32: 1>} : vector<1x16x1xi32>
    %c12_i32 = arith.constant 12 : i32
    %41 = vector.broadcast %c12_i32 : i32 to vector<1x16x1xi32>
    %42 = arith.cmpi slt, %40, %41 : vector<1x16x1xi32>
    %cst_30 = arith.constant 0.000000e+00 : f32
    %43 = vector.shape_cast %42 : vector<1x16x1xi1> to vector<1x16x1xi1>
    %44 = vector.broadcast %43 : vector<1x16x1xi1> to vector<2x16x128xi1>
    %45 = vector.broadcast %cst_30 : f32 to vector<2x16x128xf32>
    %46 = arith.select %44, %39, %45 : vector<2x16x128xi1>, vector<2x16x128xf32>
    %cst_31 = arith.constant dense<0.000000e+00> : vector<2x128xf32>
    %47 = vector.multi_reduction <add>, %46, %cst_31 [1] : vector<2x16x128xf32> to vector<2x128xf32>
    %cst_32 = arith.constant 0.0833333358 : f32
    %48 = vector.broadcast %cst_32 : f32 to vector<2x128xf32>
    %49 = arith.mulf %47, %48 : vector<2x128xf32>
    %50 = arith.truncf %49 : vector<2x128xf32> to vector<2x128xbf16>
    %c0_33 = arith.constant 0 : index
    %c0_34 = arith.constant 0 : index
    %51 = vector.load %arg5[%c0_33, %c0_34] : memref<128x128xbf16, #tpu.memory_space<vmem>>, vector<128x128xbf16>
    %cst_35 = arith.constant dense<0.000000e+00> : vector<2x128xf32>
    %52 = tpu.matmul %50, %51, %cst_35 {dimension_numbers = #tpu.dot_dimension_numbers<[1], [0], [0], [1], [0, 0, 1, 1], [], []>} : vector<2x128xbf16>, vector<128x128xbf16>, vector<2x128xf32> -> vector<2x128xf32>
    %c0_36 = arith.constant 0 : index
    %c0_37 = arith.constant 0 : index
    %53 = vector.load %arg6[%c0_36, %c0_37] : memref<1x128xf32, #tpu.memory_space<vmem>>, vector<1x128xf32>
    %54 = vector.broadcast %53 : vector<1x128xf32> to vector<2x128xf32>
    %55 = arith.addf %52, %54 : vector<2x128xf32>
    %c0_38 = arith.constant 0 : index
    %c0_39 = arith.constant 0 : index
    %56 = vector.load %arg7[%c0_38, %c0_39] : memref<2x128xf32, #tpu.memory_space<vmem>>, vector<2x128xf32>
    tpu.vector_store %arg7[%c0_38, %c0_39], %55 {strides = array<i32>} : memref<2x128xf32, #tpu.memory_space<vmem>>, vector<2x128xf32>,
    return
  }
}

</mosaic_0001>

<llo_original>
// kernel: convnet_simple_forward.1
$region0: #{convnet_simple_forward.1}
  #allocation0 [shape = 'u32[]', space=smem, size = 0x4, offset = 0x4, fixed_abs, tag = 'smem constant byte address 0x4 - core index']
  #allocation1 [shape = 'u32[144,128]{1,0:T(1,128)}', space=vmem, size = 0x12000, scoped, tag = 'internal scratch']
  %s0 = inlined_call_operand.vmem [shape: f32[32,128], index: 0, kind: input, shape index: {}]
  %s1 = inlined_call_operand.hbm [shape: bf16[3,128,128], index: 1, kind: input, shape index: {}]
  %s2 = inlined_call_operand.vmem [shape: f32[1,128], index: 2, kind: input, shape index: {}]
  %s3 = inlined_call_operand.hbm [shape: bf16[3,128,128], index: 3, kind: input, shape index: {}]
  %s4 = inlined_call_operand.vmem [shape: f32[1,128], index: 4, kind: input, shape index: {}]
  %s5 = inlined_call_operand.vmem [shape: bf16[128,128], index: 5, kind: input, shape index: {}]
  %s6 = inlined_call_operand.vmem [shape: f32[1,128], index: 6, kind: input, shape index: {}]
  %s7 = inlined_call_operand.hbm [shape: f32[2,128], index: 7, kind: output, shape index: {}]
  %s8 = sld [smem:[#allocation0]]
  $region46: #{convnet_simple_forward.1} parent=0
    _
  %s10 = ssub.s32 1, %s8
  %s11 = scalar_select 0, %s10, %s8
  $region1: #{convnet_simple_forward.1} parent=0
    #allocation2 [shape = 'u8[98304]{0}', space=vmem, size = 0x18000, scoped, tag = 'input window, operand 1, single buffered']
    #allocation3 [shape = 's32[1]{0}', space=sflag, size = 0x4, scoped, tag = 'scoped memory for convnet_simple_forward.1']
    #allocation4 [shape = 's32[1]{0}', space=sflag, size = 0x4, scoped, tag = 'scoped memory for convnet_simple_forward.1']
    #allocation5 [shape = 'u8[98304]{0}', space=vmem, size = 0x18000, scoped, tag = 'input window, operand 3, single buffered']
    #allocation6 [shape = 's32[1]{0}', space=sflag, size = 0x4, scoped, tag = 'scoped memory for convnet_simple_forward.1']
    #allocation7 [shape = 'u8[1024]{0}', space=vmem, size = 0x400, scoped, tag = 'output window, operand 0, single buffered']
    %12 = vsyncpa [#allocation3], 0
    %13 = vsyncpa [#allocation6], 0
    %14 = vsyncpa [#allocation4], 0
    // Predicated region
    $region2: #{convnet_simple_forward.1} parent=1 // pred_check
      _
    $region3: #{convnet_simple_forward.1} parent=1 // pred_check_branch
      %16 = sbr.rel (0) target = $region5
    $region4: #{convnet_simple_forward.1} parent=1 // pred_region
      _
    $region5: #{convnet_simple_forward.1} parent=1 // pred_fallthru
      _
    // Predicated region
    $region6: #{convnet_simple_forward.1} parent=1 // pred_check
      _
    $region7: #{convnet_simple_forward.1} parent=1 // pred_check_branch
      %18 = sbr.rel (0) target = $region9
    $region8: #{convnet_simple_forward.1} parent=1 // pred_region
      %s20 = ssub.s32 3072, 3072
      %21 = vsyncadd [#allocation3], %s20
      %s22 = sshll.u32 [#allocation2], 4
      %s23 = int_to_ptr.vmem [resolvable:$true] %s22
      %28 = dma.hbm_to_vmem [thread:$0]  %s1, 3072, %s23, [#allocation3], 64, 64, 4
    $region9: #{convnet_simple_forward.1} parent=1 // pred_fallthru
      _
    // Predicated region
    $region10: #{convnet_simple_forward.1} parent=1 // pred_check
      _
    $region11: #{convnet_simple_forward.1} parent=1 // pred_check_branch
      %30 = sbr.rel (0) target = $region13
    $region12: #{convnet_simple_forward.1} parent=1 // pred_region
      _
    $region13: #{convnet_simple_forward.1} parent=1 // pred_fallthru
      _
    // Predicated region
    $region14: #{convnet_simple_forward.1} parent=1 // pred_check
      _
    $region15: #{convnet_simple_forward.1} parent=1 // pred_check_branch
      %32 = sbr.rel (0) target = $region17
    $region16: #{convnet_simple_forward.1} parent=1 // pred_region
      %s34 = ssub.s32 3072, 3072
      %35 = vsyncadd [#allocation6], %s34
      %s36 = sshll.u32 [#allocation5], 4
      %s37 = int_to_ptr.vmem [resolvable:$true] %s36
      %42 = dma.hbm_to_vmem [thread:$0]  %s3, 3072, %s37, [#allocation6], 64, 64, 4
    $region17: #{convnet_simple_forward.1} parent=1 // pred_fallthru
      _
    // Predicated region
    $region18: #{convnet_simple_forward.1} parent=1 // pred_check
      _
    $region19: #{convnet_simple_forward.1} parent=1 // pred_check_branch
      %44 = sbr.rel (0) target = $region21
    $region20: #{convnet_simple_forward.1} parent=1 // pred_region
      _
    $region21: #{convnet_simple_forward.1} parent=1 // pred_fallthru
      _
    // Predicated region
    $region22: #{convnet_simple_forward.1} parent=1 // pred_check
      _
    $region23: #{convnet_simple_forward.1} parent=1 // pred_check_branch
      %46 = sbr.rel (0) target = $region25
    $region24: #{convnet_simple_forward.1} parent=1 // pred_region
      _
    $region25: #{convnet_simple_forward.1} parent=1 // pred_fallthru
      _
    // Predicated region
    $region26: #{convnet_simple_forward.1} parent=1 // pred_check
      _
    $region27: #{convnet_simple_forward.1} parent=1 // pred_check_branch
      %48 = sbr.rel (0) target = $region29
    $region28: #{convnet_simple_forward.1} parent=1 // pred_region
      _
    $region29: #{convnet_simple_forward.1} parent=1 // pred_fallthru
      _
    // Predicated region
    $region30: #{convnet_simple_forward.1} parent=1 // pred_check
      _
    $region31: #{convnet_simple_forward.1} parent=1 // pred_check_branch
      %50 = sbr.rel (0) target = $region33
    $region32: #{convnet_simple_forward.1} parent=1 // pred_region
      %51 = dma.done [#allocation3], 3072
    $region33: #{convnet_simple_forward.1} parent=1 // pred_fallthru
      _
    // Predicated region
    $region34: #{convnet_simple_forward.1} parent=1 // pred_check
      _
    $region35: #{convnet_simple_forward.1} parent=1 // pred_check_branch
      %53 = sbr.rel (0) target = $region37
    $region36: #{convnet_simple_forward.1} parent=1 // pred_region
      %54 = dma.done [#allocation6], 3072
    $region37: #{convnet_simple_forward.1} parent=1 // pred_fallthru
      _
    %v56 = vld [vmem:[%s0] sm:$0xff]
    %v57 = vld [vmem:[%s0 + $0x8] sm:$0xff]
    %v58 = vld [vmem:[%s0 + $0x10] sm:$0xff]
    %v59 = vld [vmem:[%s0 + $0x18] sm:$0xff]
    %v60 = vpack.c.bf16 %v57, %v56
    %v61 = vpack.c.bf16 %v59, %v58
    %v62 = vld [vmem:[#allocation2] sm:$0xf]
    %v63 = vld [vmem:[#allocation2 + $0x4] sm:$0xf]
    %v64 = vld [vmem:[#allocation2 + $0x8] sm:$0xf]
    %v65 = vld [vmem:[#allocation2 + $0xc] sm:$0xf]
    %v66 = vld [vmem:[#allocation2 + $0x10] sm:$0xf]
    %v67 = vld [vmem:[#allocation2 + $0x14] sm:$0xf]
    %v68 = vld [vmem:[#allocation2 + $0x18] sm:$0xf]
    %v69 = vld [vmem:[#allocation2 + $0x1c] sm:$0xf]
    %v70 = vld [vmem:[#allocation2 + $0x20] sm:$0xf]
    %v71 = vld [vmem:[#allocation2 + $0x24] sm:$0xf]
    %v72 = vld [vmem:[#allocation2 + $0x28] sm:$0xf]
    %v73 = vld [vmem:[#allocation2 + $0x2c] sm:$0xf]
    %v74 = vld [vmem:[#allocation2 + $0x30] sm:$0xf]
    %v75 = vld [vmem:[#allocation2 + $0x34] sm:$0xf]
    %v76 = vld [vmem:[#allocation2 + $0x38] sm:$0xf]
    %v77 = vld [vmem:[#allocation2 + $0x3c] sm:$0xf]
    %s78 = scalar_lea.vmem [#allocation2], 64
    %v79 = vld [vmem:[%s78] sm:$0xf]
    %v80 = vld [vmem:[%s78 + $0x4] sm:$0xf]
    %v81 = vld [vmem:[%s78 + $0x8] sm:$0xf]
    %v82 = vld [vmem:[%s78 + $0xc] sm:$0xf]
    %v83 = vld [vmem:[%s78 + $0x10] sm:$0xf]
    %v84 = vld [vmem:[%s78 + $0x14] sm:$0xf]
    %v85 = vld [vmem:[%s78 + $0x18] sm:$0xf]
    %v86 = vld [vmem:[%s78 + $0x1c] sm:$0xf]
    %v87 = vld [vmem:[%s78 + $0x20] sm:$0xf]
    %v88 = vld [vmem:[%s78 + $0x24] sm:$0xf]
    %v89 = vld [vmem:[%s78 + $0x28] sm:$0xf]
    %v90 = vld [vmem:[%s78 + $0x2c] sm:$0xf]
    %v91 = vld [vmem:[%s78 + $0x30] sm:$0xf]
    %v92 = vld [vmem:[%s78 + $0x34] sm:$0xf]
    %v93 = vld [vmem:[%s78 + $0x38] sm:$0xf]
    %v94 = vld [vmem:[%s78 + $0x3c] sm:$0xf]
    %v111 = vunpack.c.l.b16 %v79
    %v112 = vunpack.c.l.b16 %v80
    %v113 = vunpack.c.l.b16 %v81
    %v114 = vunpack.c.l.b16 %v82
    %v115 = vunpack.c.l.b16 %v83
    %v116 = vunpack.c.l.b16 %v84
    %v117 = vunpack.c.l.b16 %v85
    %v118 = vunpack.c.l.b16 %v86
    %v119 = vunpack.c.l.b16 %v87
    %v120 = vunpack.c.l.b16 %v88
    %v121 = vunpack.c.l.b16 %v89
    %v122 = vunpack.c.l.b16 %v90
    %v123 = vunpack.c.l.b16 %v91
    %v124 = vunpack.c.l.b16 %v92
    %v125 = vunpack.c.l.b16 %v93
    %v126 = vunpack.c.l.b16 %v94
    %v127 = vpack.c.b16 %v112, %v111
    %v128 = vpack.c.b16 %v114, %v113
    %v129 = vpack.c.b16 %v116, %v115
    %v130 = vpack.c.b16 %v118, %v117
    %v131 = vpack.c.b16 %v120, %v119
    %v132 = vpack.c.b16 %v122, %v121
    %v133 = vpack.c.b16 %v124, %v123
    %v134 = vpack.c.b16 %v126, %v125
    %143 = vmatprep.subr.bf16.mxu0 0
    %144 = vmatpush1.bf16.msra.mxu0 %v127
    %145 = vmatprep.subr.bf16.mxu0 0
    %146 = vmatpush1.bf16.msra.mxu0 %v128
    %147 = vmatprep.subr.bf16.mxu0 0
    %148 = vmatpush1.bf16.msra.mxu0 %v129
    %149 = vmatprep.subr.bf16.mxu0 0
    %150 = vmatpush1.bf16.msra.mxu0 %v130
    %151 = vmatprep.subr.bf16.mxu0 0
    %152 = vmatpush1.bf16.msra.mxu0 %v131
    %153 = vmatprep.subr.bf16.mxu0 0
    %154 = vmatpush1.bf16.msra.mxu0 %v132
    %155 = vmatprep.subr.bf16.mxu0 0
    %156 = vmatpush1.bf16.msra.mxu0 %v133
    %157 = vmatprep.subr.bf16.mxu0 0
    %158 = vmatpush1.bf16.msra.mxu0 %v134
    %159 = vmatprep.subr.bf16.mxu0 0
    %160 = vmatpush1.bf16.msra.mxu0 0
    %161 = vmatprep.subr.bf16.mxu0 0
    %162 = vmatpush1.bf16.msra.mxu0 0
    %163 = vmatprep.subr.bf16.mxu0 0
    %164 = vmatpush1.bf16.msra.mxu0 0
    %165 = vmatprep.subr.bf16.mxu0 0
    %166 = vmatpush1.bf16.msra.mxu0 0
    %167 = vmatprep.subr.bf16.mxu0 0
    %168 = vmatpush1.bf16.msra.mxu0 0
    %169 = vmatprep.subr.bf16.mxu0 0
    %170 = vmatpush1.bf16.msra.mxu0 0
    %171 = vmatprep.subr.bf16.mxu0 0
    %172 = vmatpush1.bf16.msra.mxu0 0
    %173 = vmatprep.subr.bf16.mxu0 0
    %174 = vmatpush1.bf16.msra.mxu0 0
    %175 = vmatprep.mubr.bf16.mxu0 0
    %176 = vmatmul.mubr.bf16.gmra.mrb[0].mxu0 %v60
    %v177 = vpop.f32.mrb[0].mxu0
    %v178 = vadd.f32 0.0, %v177
    %v179 = vpop.f32.mrb[0].mxu0
    %v180 = vpop.f32.mrb[0].mxu0
    %v181 = vadd.f32 0.0, %v180
    %v182 = vpop.f32.mrb[0].mxu0
    %183 = vmatprep.mubr.bf16.mxu0 0
    %184 = vmatmul.mubr.bf16.gmra.mrb[0].mxu0 %v61
    %v185 = vpop.f32.mrb[0].mxu0
    %v186 = vadd.f32 0.0, %v185
    %v187 = vpop.f32.mrb[0].mxu0
    %v188 = vpop.f32.mrb[0].mxu0
    %v189 = vadd.f32 0.0, %v188
    %v190 = vpop.f32.mrb[0].mxu0
    %191 = vdwg.mxu0
    %v192 = vrot.slane %v178, 1
    %v193 = vrot.slane %v181, 1
    %v194 = vrot.slane %v186, 1
    %v195 = vrot.slane %v189, 1
    %v196 = vlaneseq
    %v197 = vshrl.u32 %v196, 7
    %vm198 = vcmp.lt.s32.totalorder %v197, 7
    %v199 = vsel %vm198, %v194, %v195
    %v200 = vsel %vm198, %v193, %v194
    %v201 = vsel %vm198, %v192, %v193
    %v202 = vsel %vm198, %v195, %v192
    %v219 = vunpack.c.l.b16 %v62
    %v220 = vunpack.c.l.b16 %v63
    %v221 = vunpack.c.l.b16 %v64
    %v222 = vunpack.c.l.b16 %v65
    %v223 = vunpack.c.l.b16 %v66
    %v224 = vunpack.c.l.b16 %v67
    %v225 = vunpack.c.l.b16 %v68
    %v226 = vunpack.c.l.b16 %v69
    %v227 = vunpack.c.l.b16 %v70
    %v228 = vunpack.c.l.b16 %v71
    %v229 = vunpack.c.l.b16 %v72
    %v230 = vunpack.c.l.b16 %v73
    %v231 = vunpack.c.l.b16 %v74
    %v232 = vunpack.c.l.b16 %v75
    %v233 = vunpack.c.l.b16 %v76
    %v234 = vunpack.c.l.b16 %v77
    %v235 = vpack.c.b16 %v220, %v219
    %v236 = vpack.c.b16 %v222, %v221
    %v237 = vpack.c.b16 %v224, %v223
    %v238 = vpack.c.b16 %v226, %v225
    %v239 = vpack.c.b16 %v228, %v227
    %v240 = vpack.c.b16 %v230, %v229
    %v241 = vpack.c.b16 %v232, %v231
    %v242 = vpack.c.b16 %v234, %v233
    %251 = vmatprep.subr.bf16.mxu0 0
    %252 = vmatpush1.bf16.msra.mxu0 %v235
    %253 = vmatprep.subr.bf16.mxu0 0
    %254 = vmatpush1.bf16.msra.mxu0 %v236
    %255 = vmatprep.subr.bf16.mxu0 0
    %256 = vmatpush1.bf16.msra.mxu0 %v237
    %257 = vmatprep.subr.bf16.mxu0 0
    %258 = vmatpush1.bf16.msra.mxu0 %v238
    %259 = vmatprep.subr.bf16.mxu0 0
    %260 = vmatpush1.bf16.msra.mxu0 %v239
    %261 = vmatprep.subr.bf16.mxu0 0
    %262 = vmatpush1.bf16.msra.mxu0 %v240
    %263 = vmatprep.subr.bf16.mxu0 0
    %264 = vmatpush1.bf16.msra.mxu0 %v241
    %265 = vmatprep.subr.bf16.mxu0 0
    %266 = vmatpush1.bf16.msra.mxu0 %v242
    %267 = vmatprep.subr.bf16.mxu0 0
    %268 = vmatpush1.bf16.msra.mxu0 0
    %269 = vmatprep.subr.bf16.mxu0 0
    %270 = vmatpush1.bf16.msra.mxu0 0
    %271 = vmatprep.subr.bf16.mxu0 0
    %272 = vmatpush1.bf16.msra.mxu0 0
    %273 = vmatprep.subr.bf16.mxu0 0
    %274 = vmatpush1.bf16.msra.mxu0 0
    %275 = vmatprep.subr.bf16.mxu0 0
    %276 = vmatpush1.bf16.msra.mxu0 0
    %277 = vmatprep.subr.bf16.mxu0 0
    %278 = vmatpush1.bf16.msra.mxu0 0
    %279 = vmatprep.subr.bf16.mxu0 0
    %280 = vmatpush1.bf16.msra.mxu0 0
    %281 = vmatprep.subr.bf16.mxu0 0
    %282 = vmatpush1.bf16.msra.mxu0 0
    %283 = vmatprep.mubr.bf16.mxu0 0
    %284 = vmatmul.mubr.bf16.gmra.mrb[0].mxu0 %v60
    %v285 = vpop.f32.mrb[0].mxu0
    %v286 = vadd.f32 %v201, %v285
    %v287 = vpop.f32.mrb[0].mxu0
    %v288 = vpop.f32.mrb[0].mxu0
    %v289 = vadd.f32 %v200, %v288
    %v290 = vpop.f32.mrb[0].mxu0
    %291 = vmatprep.mubr.bf16.mxu0 0
    %292 = vmatmul.mubr.bf16.gmra.mrb[0].mxu0 %v61
    %v293 = vpop.f32.mrb[0].mxu0
    %v294 = vadd.f32 %v199, %v293
    %v295 = vpop.f32.mrb[0].mxu0
    %v296 = vpop.f32.mrb[0].mxu0
    %v297 = vadd.f32 %v202, %v296
    %v298 = vpop.f32.mrb[0].mxu0
    %299 = vdwg.mxu0
    %s300 = scalar_lea.vmem [#allocation2], 128
    %v301 = vld [vmem:[%s300] sm:$0xf]
    %v302 = vld [vmem:[%s300 + $0x4] sm:$0xf]
    %v303 = vld [vmem:[%s300 + $0x8] sm:$0xf]
    %v304 = vld [vmem:[%s300 + $0xc] sm:$0xf]
    %v305 = vld [vmem:[%s300 + $0x10] sm:$0xf]
    %v306 = vld [vmem:[%s300 + $0x14] sm:$0xf]
    %v307 = vld [vmem:[%s300 + $0x18] sm:$0xf]
    %v308 = vld [vmem:[%s300 + $0x1c] sm:$0xf]
    %v309 = vld [vmem:[%s300 + $0x20] sm:$0xf]
    %v310 = vld [vmem:[%s300 + $0x24] sm:$0xf]
    %v311 = vld [vmem:[%s300 + $0x28] sm:$0xf]
    %v312 = vld [vmem:[%s300 + $0x2c] sm:$0xf]
    %v313 = vld [vmem:[%s300 + $0x30] sm:$0xf]
    %v314 = vld [vmem:[%s300 + $0x34] sm:$0xf]
    %v315 = vld [vmem:[%s300 + $0x38] sm:$0xf]
    %v316 = vld [vmem:[%s300 + $0x3c] sm:$0xf]
    %v333 = vunpack.c.l.b16 %v301
    %v334 = vunpack.c.l.b16 %v302
    %v335 = vunpack.c.l.b16 %v303
    %v336 = vunpack.c.l.b16 %v304
    %v337 = vunpack.c.l.b16 %v305
    %v338 = vunpack.c.l.b16 %v306
    %v339 = vunpack.c.l.b16 %v307
    %v340 = vunpack.c.l.b16 %v308
    %v341 = vunpack.c.l.b16 %v309
    %v342 = vunpack.c.l.b16 %v310
    %v343 = vunpack.c.l.b16 %v311
    %v344 = vunpack.c.l.b16 %v312
    %v345 = vunpack.c.l.b16 %v313
    %v346 = vunpack.c.l.b16 %v314
    %v347 = vunpack.c.l.b16 %v315
    %v348 = vunpack.c.l.b16 %v316
    %v349 = vpack.c.b16 %v334, %v333
    %v350 = vpack.c.b16 %v336, %v335
    %v351 = vpack.c.b16 %v338, %v337
    %v352 = vpack.c.b16 %v340, %v339
    %v353 = vpack.c.b16 %v342, %v341
    %v354 = vpack.c.b16 %v344, %v343
    %v355 = vpack.c.b16 %v346, %v345
    %v356 = vpack.c.b16 %v348, %v347
    %365 = vmatprep.subr.bf16.mxu0 0
    %366 = vmatpush1.bf16.msra.mxu0 %v349
    %367 = vmatprep.subr.bf16.mxu0 0
    %368 = vmatpush1.bf16.msra.mxu0 %v350
    %369 = vmatprep.subr.bf16.mxu0 0
    %370 = vmatpush1.bf16.msra.mxu0 %v351
    %371 = vmatprep.subr.bf16.mxu0 0
    %372 = vmatpush1.bf16.msra.mxu0 %v352
    %373 = vmatprep.subr.bf16.mxu0 0
    %374 = vmatpush1.bf16.msra.mxu0 %v353
    %375 = vmatprep.subr.bf16.mxu0 0
    %376 = vmatpush1.bf16.msra.mxu0 %v354
    %377 = vmatprep.subr.bf16.mxu0 0
    %378 = vmatpush1.bf16.msra.mxu0 %v355
    %379 = vmatprep.subr.bf16.mxu0 0
    %380 = vmatpush1.bf16.msra.mxu0 %v356
    %381 = vmatprep.subr.bf16.mxu0 0
    %382 = vmatpush1.bf16.msra.mxu0 0
    %383 = vmatprep.subr.bf16.mxu0 0
    %384 = vmatpush1.bf16.msra.mxu0 0
    %385 = vmatprep.subr.bf16.mxu0 0
    %386 = vmatpush1.bf16.msra.mxu0 0
    %387 = vmatprep.subr.bf16.mxu0 0
    %388 = vmatpush1.bf16.msra.mxu0 0
    %389 = vmatprep.subr.bf16.mxu0 0
    %390 = vmatpush1.bf16.msra.mxu0 0
    %391 = vmatprep.subr.bf16.mxu0 0
    %392 = vmatpush1.bf16.msra.mxu0 0
    %393 = vmatprep.subr.bf16.mxu0 0
    %394 = vmatpush1.bf16.msra.mxu0 0
    %395 = vmatprep.subr.bf16.mxu0 0
    %396 = vmatpush1.bf16.msra.mxu0 0
    %397 = vmatprep.mubr.bf16.mxu0 0
    %398 = vmatmul.mubr.bf16.gmra.mrb[0].mxu0 %v60
    %v399 = vpop.f32.mrb[0].mxu0
    %v400 = vadd.f32 0.0, %v399
    %v401 = vpop.f32.mrb[0].mxu0
    %v402 = vpop.f32.mrb[0].mxu0
    %v403 = vadd.f32 0.0, %v402
    %v404 = vpop.f32.mrb[0].mxu0
    %405 = vmatprep.mubr.bf16.mxu0 0
    %406 = vmatmul.mubr.bf16.gmra.mrb[0].mxu0 %v61
    %v407 = vpop.f32.mrb[0].mxu0
    %v408 = vadd.f32 0.0, %v407
    %v409 = vpop.f32.mrb[0].mxu0
    %v410 = vpop.f32.mrb[0].mxu0
    %v411 = vadd.f32 0.0, %v410
    %v412 = vpop.f32.mrb[0].mxu0
    %413 = vdwg.mxu0
    %v414 = vrot.slane %v400, 2
    %v415 = vrot.slane %v403, 2
    %v416 = vrot.slane %v408, 2
    %v417 = vrot.slane %v411, 2
    %vm418 = vcmp.lt.s32.totalorder %v197, 6
    %v419 = vsel %vm418, %v416, %v417
    %v420 = vsel %vm418, %v415, %v416
    %v421 = vsel %vm418, %v414, %v415
    %v422 = vsel %vm418, %v417, %v414
    %v423 = vadd.f32 %v286, %v421
    %v424 = vadd.f32 %v289, %v420
    %v425 = vadd.f32 %v294, %v419
    %v426 = vadd.f32 %v297, %v422
    %v427 = vld [vmem:[%s2] sm:$0x1]
    %v429 = vlaneseq
    %v430 = vshrl.u32 %v429, 7
    %v431 = vsub.s32 0, %v430
    %v432 = vrot.slane %v427, %v431
    %v434 = vadd.f32 %v423, %v432
    %v435 = vadd.f32 %v424, %v432
    %v436 = vadd.f32 %v425, %v432
    %v437 = vadd.f32 %v426, %v432
    %v438 = vmax.f32 %v434, 0.0
    %v439 = vmax.f32 %v435, 0.0
    %v440 = vmax.f32 %v436, 0.0
    %v441 = vmax.f32 %v437, 0.0
    %v442 = vpack.c.bf16 %v439, %v438
    %v443 = vpack.c.bf16 %v441, %v440
    %v444 = vld [vmem:[#allocation5] sm:$0xf]
    %v445 = vld [vmem:[#allocation5 + $0x4] sm:$0xf]
    %v446 = vld [vmem:[#allocation5 + $0x8] sm:$0xf]
    %v447 = vld [vmem:[#allocation5 + $0xc] sm:$0xf]
    %v448 = vld [vmem:[#allocation5 + $0x10] sm:$0xf]
    %v449 = vld [vmem:[#allocation5 + $0x14] sm:$0xf]
    %v450 = vld [vmem:[#allocation5 + $0x18] sm:$0xf]
    %v451 = vld [vmem:[#allocation5 + $0x1c] sm:$0xf]
    %v452 = vld [vmem:[#allocation5 + $0x20] sm:$0xf]
    %v453 = vld [vmem:[#allocation5 + $0x24] sm:$0xf]
    %v454 = vld [vmem:[#allocation5 + $0x28] sm:$0xf]
    %v455 = vld [vmem:[#allocation5 + $0x2c] sm:$0xf]
    %v456 = vld [vmem:[#allocation5 + $0x30] sm:$0xf]
    %v457 = vld [vmem:[#allocation5 + $0x34] sm:$0xf]
    %v458 = vld [vmem:[#allocation5 + $0x38] sm:$0xf]
    %v459 = vld [vmem:[#allocation5 + $0x3c] sm:$0xf]
    %s460 = scalar_lea.vmem [#allocation5], 64
    %v461 = vld [vmem:[%s460] sm:$0xf]
    %v462 = vld [vmem:[%s460 + $0x4] sm:$0xf]
    %v463 = vld [vmem:[%s460 + $0x8] sm:$0xf]
    %v464 = vld [vmem:[%s460 + $0xc] sm:$0xf]
    %v465 = vld [vmem:[%s460 + $0x10] sm:$0xf]
    %v466 = vld [vmem:[%s460 + $0x14] sm:$0xf]
    %v467 = vld [vmem:[%s460 + $0x18] sm:$0xf]
    %v468 = vld [vmem:[%s460 + $0x1c] sm:$0xf]
    %v469 = vld [vmem:[%s460 + $0x20] sm:$0xf]
    %v470 = vld [vmem:[%s460 + $0x24] sm:$0xf]
    %v471 = vld [vmem:[%s460 + $0x28] sm:$0xf]
    %v472 = vld [vmem:[%s460 + $0x2c] sm:$0xf]
    %v473 = vld [vmem:[%s460 + $0x30] sm:$0xf]
    %v474 = vld [vmem:[%s460 + $0x34] sm:$0xf]
    %v475 = vld [vmem:[%s460 + $0x38] sm:$0xf]
    %v476 = vld [vmem:[%s460 + $0x3c] sm:$0xf]
    %v493 = vunpack.c.l.b16 %v461
    %v494 = vunpack.c.l.b16 %v462
    %v495 = vunpack.c.l.b16 %v463
    %v496 = vunpack.c.l.b16 %v464
    %v497 = vunpack.c.l.b16 %v465
    %v498 = vunpack.c.l.b16 %v466
    %v499 = vunpack.c.l.b16 %v467
    %v500 = vunpack.c.l.b16 %v468
    %v501 = vunpack.c.l.b16 %v469
    %v502 = vunpack.c.l.b16 %v470
    %v503 = vunpack.c.l.b16 %v471
    %v504 = vunpack.c.l.b16 %v472
    %v505 = vunpack.c.l.b16 %v473
    %v506 = vunpack.c.l.b16 %v474
    %v507 = vunpack.c.l.b16 %v475
    %v508 = vunpack.c.l.b16 %v476
    %v509 = vpack.c.b16 %v494, %v493
    %v510 = vpack.c.b16 %v496, %v495
    %v511 = vpack.c.b16 %v498, %v497
    %v512 = vpack.c.b16 %v500, %v499
    %v513 = vpack.c.b16 %v502, %v501
    %v514 = vpack.c.b16 %v504, %v503
    %v515 = vpack.c.b16 %v506, %v505
    %v516 = vpack.c.b16 %v508, %v507
    %525 = vmatprep.subr.bf16.mxu0 0
    %526 = vmatpush1.bf16.msra.mxu0 %v509
    %527 = vmatprep.subr.bf16.mxu0 0
    %528 = vmatpush1.bf16.msra.mxu0 %v510
    %529 = vmatprep.subr.bf16.mxu0 0
    %530 = vmatpush1.bf16.msra.mxu0 %v511
    %531 = vmatprep.subr.bf16.mxu0 0
    %532 = vmatpush1.bf16.msra.mxu0 %v512
    %533 = vmatprep.subr.bf16.mxu0 0
    %534 = vmatpush1.bf16.msra.mxu0 %v513
    %535 = vmatprep.subr.bf16.mxu0 0
    %536 = vmatpush1.bf16.msra.mxu0 %v514
    %537 = vmatprep.subr.bf16.mxu0 0
    %538 = vmatpush1.bf16.msra.mxu0 %v515
    %539 = vmatprep.subr.bf16.mxu0 0
    %540 = vmatpush1.bf16.msra.mxu0 %v516
    %541 = vmatprep.subr.bf16.mxu0 0
    %542 = vmatpush1.bf16.msra.mxu0 0
    %543 = vmatprep.subr.bf16.mxu0 0
    %544 = vmatpush1.bf16.msra.mxu0 0
    %545 = vmatprep.subr.bf16.mxu0 0
    %546 = vmatpush1.bf16.msra.mxu0 0
    %547 = vmatprep.subr.bf16.mxu0 0
    %548 = vmatpush1.bf16.msra.mxu0 0
    %549 = vmatprep.subr.bf16.mxu0 0
    %550 = vmatpush1.bf16.msra.mxu0 0
    %551 = vmatprep.subr.bf16.mxu0 0
    %552 = vmatpush1.bf16.msra.mxu0 0
    %553 = vmatprep.subr.bf16.mxu0 0
    %554 = vmatpush1.bf16.msra.mxu0 0
    %555 = vmatprep.subr.bf16.mxu0 0
    %556 = vmatpush1.bf16.msra.mxu0 0
    %557 = vmatprep.mubr.bf16.mxu0 0
    %558 = vmatmul.mubr.bf16.gmra.mrb[0].mxu0 %v442
    %v559 = vpop.f32.mrb[0].mxu0
    %v560 = vadd.f32 0.0, %v559
    %v561 = vpop.f32.mrb[0].mxu0
    %v562 = vpop.f32.mrb[0].mxu0
    %v563 = vadd.f32 0.0, %v562
    %v564 = vpop.f32.mrb[0].mxu0
    %565 = vmatprep.mubr.bf16.mxu0 0
    %566 = vmatmul.mubr.bf16.gmra.mrb[0].mxu0 %v443
    %v567 = vpop.f32.mrb[0].mxu0
    %v568 = vadd.f32 0.0, %v567
    %v569 = vpop.f32.mrb[0].mxu0
    %v570 = vpop.f32.mrb[0].mxu0
    %v571 = vadd.f32 0.0, %v570
    %v572 = vpop.f32.mrb[0].mxu0
    %573 = vdwg.mxu0
    %v574 = vrot.slane %v560, 1
    %v575 = vrot.slane %v563, 1
    %v576 = vrot.slane %v568, 1
    %v577 = vrot.slane %v571, 1
    %v578 = vsel %vm198, %v576, %v577
    %v579 = vsel %vm198, %v575, %v576
    %v580 = vsel %vm198, %v574, %v575
    %v581 = vsel %vm198, %v577, %v574
    %v598 = vunpack.c.l.b16 %v444
    %v599 = vunpack.c.l.b16 %v445
    %v600 = vunpack.c.l.b16 %v446
    %v601 = vunpack.c.l.b16 %v447
    %v602 = vunpack.c.l.b16 %v448
    %v603 = vunpack.c.l.b16 %v449
    %v604 = vunpack.c.l.b16 %v450
    %v605 = vunpack.c.l.b16 %v451
    %v606 = vunpack.c.l.b16 %v452
    %v607 = vunpack.c.l.b16 %v453
    %v608 = vunpack.c.l.b16 %v454
    %v609 = vunpack.c.l.b16 %v455
    %v610 = vunpack.c.l.b16 %v456
    %v611 = vunpack.c.l.b16 %v457
    %v612 = vunpack.c.l.b16 %v458
    %v613 = vunpack.c.l.b16 %v459
    %v614 = vpack.c.b16 %v599, %v598
    %v615 = vpack.c.b16 %v601, %v600
    %v616 = vpack.c.b16 %v603, %v602
    %v617 = vpack.c.b16 %v605, %v604
    %v618 = vpack.c.b16 %v607, %v606
    %v619 = vpack.c.b16 %v609, %v608
    %v620 = vpack.c.b16 %v611, %v610
    %v621 = vpack.c.b16 %v613, %v612
    %630 = vmatprep.subr.bf16.mxu0 0
    %631 = vmatpush1.bf16.msra.mxu0 %v614
    %632 = vmatprep.subr.bf16.mxu0 0
    %633 = vmatpush1.bf16.msra.mxu0 %v615
    %634 = vmatprep.subr.bf16.mxu0 0
    %635 = vmatpush1.bf16.msra.mxu0 %v616
    %636 = vmatprep.subr.bf16.mxu0 0
    %637 = vmatpush1.bf16.msra.mxu0 %v617
    %638 = vmatprep.subr.bf16.mxu0 0
    %639 = vmatpush1.bf16.msra.mxu0 %v618
    %640 = vmatprep.subr.bf16.mxu0 0
    %641 = vmatpush1.bf16.msra.mxu0 %v619
    %642 = vmatprep.subr.bf16.mxu0 0
    %643 = vmatpush1.bf16.msra.mxu0 %v620
    %644 = vmatprep.subr.bf16.mxu0 0
    %645 = vmatpush1.bf16.msra.mxu0 %v621
    %646 = vmatprep.subr.bf16.mxu0 0
    %647 = vmatpush1.bf16.msra.mxu0 0
    %648 = vmatprep.subr.bf16.mxu0 0
    %649 = vmatpush1.bf16.msra.mxu0 0
    %650 = vmatprep.subr.bf16.mxu0 0
    %651 = vmatpush1.bf16.msra.mxu0 0
    %652 = vmatprep.subr.bf16.mxu0 0
    %653 = vmatpush1.bf16.msra.mxu0 0
    %654 = vmatprep.subr.bf16.mxu0 0
    %655 = vmatpush1.bf16.msra.mxu0 0
    %656 = vmatprep.subr.bf16.mxu0 0
    %657 = vmatpush1.bf16.msra.mxu0 0
    %658 = vmatprep.subr.bf16.mxu0 0
    %659 = vmatpush1.bf16.msra.mxu0 0
    %660 = vmatprep.subr.bf16.mxu0 0
    %661 = vmatpush1.bf16.msra.mxu0 0
    %662 = vmatprep.mubr.bf16.mxu0 0
    %663 = vmatmul.mubr.bf16.gmra.mrb[0].mxu0 %v442
    %v664 = vpop.f32.mrb[0].mxu0
    %v665 = vadd.f32 %v580, %v664
    %v666 = vpop.f32.mrb[0].mxu0
    %v667 = vpop.f32.mrb[0].mxu0
    %v668 = vadd.f32 %v579, %v667
    %v669 = vpop.f32.mrb[0].mxu0
    %670 = vmatprep.mubr.bf16.mxu0 0
    %671 = vmatmul.mubr.bf16.gmra.mrb[0].mxu0 %v443
    %v672 = vpop.f32.mrb[0].mxu0
    %v673 = vadd.f32 %v578, %v672
    %v674 = vpop.f32.mrb[0].mxu0
    %v675 = vpop.f32.mrb[0].mxu0
    %v676 = vadd.f32 %v581, %v675
    %v677 = vpop.f32.mrb[0].mxu0
    %678 = vdwg.mxu0
    %s679 = scalar_lea.vmem [#allocation5], 128
    %v680 = vld [vmem:[%s679] sm:$0xf]
    %v681 = vld [vmem:[%s679 + $0x4] sm:$0xf]
    %v682 = vld [vmem:[%s679 + $0x8] sm:$0xf]
    %v683 = vld [vmem:[%s679 + $0xc] sm:$0xf]
    %v684 = vld [vmem:[%s679 + $0x10] sm:$0xf]
    %v685 = vld [vmem:[%s679 + $0x14] sm:$0xf]
    %v686 = vld [vmem:[%s679 + $0x18] sm:$0xf]
    %v687 = vld [vmem:[%s679 + $0x1c] sm:$0xf]
    %v688 = vld [vmem:[%s679 + $0x20] sm:$0xf]
    %v689 = vld [vmem:[%s679 + $0x24] sm:$0xf]
    %v690 = vld [vmem:[%s679 + $0x28] sm:$0xf]
    %v691 = vld [vmem:[%s679 + $0x2c] sm:$0xf]
    %v692 = vld [vmem:[%s679 + $0x30] sm:$0xf]
    %v693 = vld [vmem:[%s679 + $0x34] sm:$0xf]
    %v694 = vld [vmem:[%s679 + $0x38] sm:$0xf]
    %v695 = vld [vmem:[%s679 + $0x3c] sm:$0xf]
    %v712 = vunpack.c.l.b16 %v680
    %v713 = vunpack.c.l.b16 %v681
    %v714 = vunpack.c.l.b16 %v682
    %v715 = vunpack.c.l.b16 %v683
    %v716 = vunpack.c.l.b16 %v684
    %v717 = vunpack.c.l.b16 %v685
    %v718 = vunpack.c.l.b16 %v686
    %v719 = vunpack.c.l.b16 %v687
    %v720 = vunpack.c.l.b16 %v688
    %v721 = vunpack.c.l.b16 %v689
    %v722 = vunpack.c.l.b16 %v690
    %v723 = vunpack.c.l.b16 %v691
    %v724 = vunpack.c.l.b16 %v692
    %v725 = vunpack.c.l.b16 %v693
    %v726 = vunpack.c.l.b16 %v694
    %v727 = vunpack.c.l.b16 %v695
    %v728 = vpack.c.b16 %v713, %v712
    %v729 = vpack.c.b16 %v715, %v714
    %v730 = vpack.c.b16 %v717, %v716
    %v731 = vpack.c.b16 %v719, %v718
    %v732 = vpack.c.b16 %v721, %v720
    %v733 = vpack.c.b16 %v723, %v722
    %v734 = vpack.c.b16 %v725, %v724
    %v735 = vpack.c.b16 %v727, %v726
    %744 = vmatprep.subr.bf16.mxu0 0
    %745 = vmatpush1.bf16.msra.mxu0 %v728
    %746 = vmatprep.subr.bf16.mxu0 0
    %747 = vmatpush1.bf16.msra.mxu0 %v729
    %748 = vmatprep.subr.bf16.mxu0 0
    %749 = vmatpush1.bf16.msra.mxu0 %v730
    %750 = vmatprep.subr.bf16.mxu0 0
    %751 = vmatpush1.bf16.msra.mxu0 %v731
    %752 = vmatprep.subr.bf16.mxu0 0
    %753 = vmatpush1.bf16.msra.mxu0 %v732
    %754 = vmatprep.subr.bf16.mxu0 0
    %755 = vmatpush1.bf16.msra.mxu0 %v733
    %756 = vmatprep.subr.bf16.mxu0 0
    %757 = vmatpush1.bf16.msra.mxu0 %v734
    %758 = vmatprep.subr.bf16.mxu0 0
    %759 = vmatpush1.bf16.msra.mxu0 %v735
    %760 = vmatprep.subr.bf16.mxu0 0
    %761 = vmatpush1.bf16.msra.mxu0 0
    %762 = vmatprep.subr.bf16.mxu0 0
    %763 = vmatpush1.bf16.msra.mxu0 0
    %764 = vmatprep.subr.bf16.mxu0 0
    %765 = vmatpush1.bf16.msra.mxu0 0
    %766 = vmatprep.subr.bf16.mxu0 0
    %767 = vmatpush1.bf16.msra.mxu0 0
    %768 = vmatprep.subr.bf16.mxu0 0
    %769 = vmatpush1.bf16.msra.mxu0 0
    %770 = vmatprep.subr.bf16.mxu0 0
    %771 = vmatpush1.bf16.msra.mxu0 0
    %772 = vmatprep.subr.bf16.mxu0 0
    %773 = vmatpush1.bf16.msra.mxu0 0
    %774 = vmatprep.subr.bf16.mxu0 0
    %775 = vmatpush1.bf16.msra.mxu0 0
    %776 = vmatprep.mubr.bf16.mxu0 0
    %777 = vmatmul.mubr.bf16.gmra.mrb[0].mxu0 %v442
    %v778 = vpop.f32.mrb[0].mxu0
    %v779 = vadd.f32 0.0, %v778
    %v780 = vpop.f32.mrb[0].mxu0
    %v781 = vpop.f32.mrb[0].mxu0
    %v782 = vadd.f32 0.0, %v781
    %v783 = vpop.f32.mrb[0].mxu0
    %784 = vmatprep.mubr.bf16.mxu0 0
    %785 = vmatmul.mubr.bf16.gmra.mrb[0].mxu0 %v443
    %v786 = vpop.f32.mrb[0].mxu0
    %v787 = vadd.f32 0.0, %v786
    %v788 = vpop.f32.mrb[0].mxu0
    %v789 = vpop.f32.mrb[0].mxu0
    %v790 = vadd.f32 0.0, %v789
    %v791 = vpop.f32.mrb[0].mxu0
    %792 = vdwg.mxu0
    %v793 = vrot.slane %v779, 2
    %v794 = vrot.slane %v782, 2
    %v795 = vrot.slane %v787, 2
    %v796 = vrot.slane %v790, 2
    %v797 = vsel %vm418, %v795, %v796
    %v798 = vsel %vm418, %v794, %v795
    %v799 = vsel %vm418, %v793, %v794
    %v800 = vsel %vm418, %v796, %v793
    %v801 = vadd.f32 %v665, %v799
    %v802 = vadd.f32 %v668, %v798
    %v803 = vadd.f32 %v673, %v797
    %v804 = vadd.f32 %v676, %v800
    %v805 = vld [vmem:[%s4] sm:$0x1]
    %v807 = vlaneseq
    %v808 = vshrl.u32 %v807, 7
    %v809 = vsub.s32 0, %v808
    %v810 = vrot.slane %v805, %v809
    %v812 = vadd.f32 %v801, %v810
    %v813 = vadd.f32 %v802, %v810
    %v814 = vadd.f32 %v803, %v810
    %v815 = vadd.f32 %v804, %v810
    %v816 = vmax.f32 %v812, 0.0
    %v817 = vmax.f32 %v813, 0.0
    %v818 = vmax.f32 %v814, 0.0
    %v819 = vmax.f32 %v815, 0.0
    %v820 = vadd.s32 %v197, 8
    %vm821 = vcmp.lt.s32.totalorder %v197, 12
    %vm822 = vcmp.lt.s32.totalorder %v820, 12
    %v823 = vsel %vm821, 1, 0
    %v824 = vsel %vm822, 1, 0
    %vm825 = vcmp.eq.s32.totalorder %v823, 1
    %vm826 = vcmp.eq.s32.totalorder %v824, 1
    %v827 = vsel %vm825, %v816, 0.0
    %v828 = vsel %vm826, %v817, 0.0
    %v829 = vsel %vm825, %v818, 0.0
    %v830 = vsel %vm826, %v819, 0.0
    %v831 = vadd.f32 %v827, %v828
    %v832 = vrot.slane %v831, 4
    %v833 = vadd.f32 %v831, %v832
    %v834 = vrot.slane %v833, 2
    %v835 = vadd.f32 %v833, %v834
    %v836 = vrot.slane %v835, 1
    %v837 = vadd.f32 %v835, %v836
    %v838 = vadd.f32 %v829, %v830
    %v839 = vrot.slane %v838, 4
    %v840 = vadd.f32 %v838, %v839
    %v841 = vrot.slane %v840, 2
    %v842 = vadd.f32 %v840, %v841
    %v843 = vrot.slane %v842, 1
    %v844 = vadd.f32 %v842, %v843
    %v845 = vmul.f32 %v837, 0.083333336
    %v846 = vmul.f32 %v844, 0.083333336
    %v847 = vpack.c.bf16 %v845, %v845
    %v848 = vpack.c.bf16 %v846, %v846
    %v849 = vld [vmem:[%s5] sm:$0xf]
    %v850 = vld [vmem:[%s5 + $0x4] sm:$0xf]
    %v851 = vld [vmem:[%s5 + $0x8] sm:$0xf]
    %v852 = vld [vmem:[%s5 + $0xc] sm:$0xf]
    %v853 = vld [vmem:[%s5 + $0x10] sm:$0xf]
    %v854 = vld [vmem:[%s5 + $0x14] sm:$0xf]
    %v855 = vld [vmem:[%s5 + $0x18] sm:$0xf]
    %v856 = vld [vmem:[%s5 + $0x1c] sm:$0xf]
    %v857 = vld [vmem:[%s5 + $0x20] sm:$0xf]
    %v858 = vld [vmem:[%s5 + $0x24] sm:$0xf]
    %v859 = vld [vmem:[%s5 + $0x28] sm:$0xf]
    %v860 = vld [vmem:[%s5 + $0x2c] sm:$0xf]
    %v861 = vld [vmem:[%s5 + $0x30] sm:$0xf]
    %v862 = vld [vmem:[%s5 + $0x34] sm:$0xf]
    %v863 = vld [vmem:[%s5 + $0x38] sm:$0xf]
    %v864 = vld [vmem:[%s5 + $0x3c] sm:$0xf]
    %v865 = vld [vmem:[%s6] sm:$0x1]
    %v867 = vlaneseq
    %v868 = vshrl.u32 %v867, 7
    %v869 = vsub.s32 0, %v868
    %v870 = vrot.slane %v865, %v869
    %v874 = vunpack.c.l.b16 %v847
    %v875 = vunpack.c.l.b16 %v848
    %vm876 = vcmask 1041409
    %v877 = vsel %vm876, %v875, %v874
    %v878 = vpack.c.b16 %v877, %v877
    %v896 = vunpack.c.l.b16 %v849
    %v897 = vunpack.c.l.b16 %v850
    %v898 = vunpack.c.l.b16 %v851
    %v899 = vunpack.c.l.b16 %v852
    %v900 = vunpack.c.l.b16 %v853
    %v901 = vunpack.c.l.b16 %v854
    %v902 = vunpack.c.l.b16 %v855
    %v903 = vunpack.c.l.b16 %v856
    %v904 = vunpack.c.l.b16 %v857
    %v905 = vunpack.c.l.b16 %v858
    %v906 = vunpack.c.l.b16 %v859
    %v907 = vunpack.c.l.b16 %v860
    %v908 = vunpack.c.l.b16 %v861
    %v909 = vunpack.c.l.b16 %v862
    %v910 = vunpack.c.l.b16 %v863
    %v911 = vunpack.c.l.b16 %v864
    %v912 = vpack.c.b16 %v897, %v896
    %v913 = vpack.c.b16 %v899, %v898
    %v914 = vpack.c.b16 %v901, %v900
    %v915 = vpack.c.b16 %v903, %v902
    %v916 = vpack.c.b16 %v905, %v904
    %v917 = vpack.c.b16 %v907, %v906
    %v918 = vpack.c.b16 %v909, %v908
    %v919 = vpack.c.b16 %v911, %v910
    %928 = vmatprep.subr.bf16.mxu0 0
    %929 = vmatpush1.bf16.msra.mxu0 %v912
    %930 = vmatprep.subr.bf16.mxu0 0
    %931 = vmatpush1.bf16.msra.mxu0 %v913
    %932 = vmatprep.subr.bf16.mxu0 0
    %933 = vmatpush1.bf16.msra.mxu0 %v914
    %934 = vmatprep.subr.bf16.mxu0 0
    %935 = vmatpush1.bf16.msra.mxu0 %v915
    %936 = vmatprep.subr.bf16.mxu0 0
    %937 = vmatpush1.bf16.msra.mxu0 %v916
    %938 = vmatprep.subr.bf16.mxu0 0
    %939 = vmatpush1.bf16.msra.mxu0 %v917
    %940 = vmatprep.subr.bf16.mxu0 0
    %941 = vmatpush1.bf16.msra.mxu0 %v918
    %942 = vmatprep.subr.bf16.mxu0 0
    %943 = vmatpush1.bf16.msra.mxu0 %v919
    %944 = vmatprep.subr.bf16.mxu0 0
    %945 = vmatpush1.bf16.msra.mxu0 0
    %946 = vmatprep.subr.bf16.mxu0 0
    %947 = vmatpush1.bf16.msra.mxu0 0
    %948 = vmatprep.subr.bf16.mxu0 0
    %949 = vmatpush1.bf16.msra.mxu0 0
    %950 = vmatprep.subr.bf16.mxu0 0
    %951 = vmatpush1.bf16.msra.mxu0 0
    %952 = vmatprep.subr.bf16.mxu0 0
    %953 = vmatpush1.bf16.msra.mxu0 0
    %954 = vmatprep.subr.bf16.mxu0 0
    %955 = vmatpush1.bf16.msra.mxu0 0
    %956 = vmatprep.subr.bf16.mxu0 0
    %957 = vmatpush1.bf16.msra.mxu0 0
    %958 = vmatprep.subr.bf16.mxu0 0
    %959 = vmatpush1.bf16.msra.mxu0 0
    %960 = vmatprep.mubr.bf16.mxu0 0
    %961 = vmatmul.mubr.bf16.gmra.mrb[0].mxu0 %v878
    %v962 = vpop.f32.mrb[0].mxu0
    %v963 = vadd.f32 %v870, %v962
    %v964 = vpop.f32.mrb[0].mxu0
    %v965 = vpop.f32.mrb[0].mxu0
    %v966 = vpop.f32.mrb[0].mxu0
    %967 = vdwg.mxu0
    %968 = vst [vmem:[#allocation7] sm:$0x3] %v963
    // Predicated region
    $region38: #{convnet_simple_forward.1} parent=1 // pred_check
      _
    $region39: #{convnet_simple_forward.1} parent=1 // pred_check_branch
      %970 = sbr.rel (0) target = $region41
    $region40: #{convnet_simple_forward.1} parent=1 // pred_region
      %s972 = ssub.s32 32, 32
      %973 = vsyncadd [#allocation4], %s972
      %s975 = sshll.u32 [#allocation7], 4
      %s976 = int_to_ptr.vmem [resolvable:$true] %s975
      %978 = dma.vmem_to_hbm [thread:$0]  %s976, 32, %s7, [#allocation4]
    $region41: #{convnet_simple_forward.1} parent=1 // pred_fallthru
      _
    // Predicated region
    $region42: #{convnet_simple_forward.1} parent=1 // pred_check
      _
    $region43: #{convnet_simple_forward.1} parent=1 // pred_check_branch
      %980 = sbr.rel (0) target = $region45
    $region44: #{convnet_simple_forward.1} parent=1 // pred_region
      %981 = dma.done [#allocation4], 32
    $region45: #{convnet_simple_forward.1} parent=1 // pred_fallthru
      _
    %982 = vsyncpa [#allocation3], 1
    %983 = vsyncpa [#allocation6], 1
    %984 = vsyncpa [#allocation4], 1

</llo_original>
